<compile_context>
chip_gen: v5e
topology: v5e:2x2
jax: 0.10.0
libtpu: 0.0.40
codegen_flags: <defaults>
</compile_context>

<pallas_src>
import jax
import jax.numpy as jnp
from jax.experimental import pallas as pl
from jax.experimental.pallas import tpu as pltpu

LN_EPS = 1e-5  # nn.LayerNorm default


def _round_up(n, m):
    return ((n + m - 1) // m) * m


def _layer_norm(x, gamma, beta):
    # x: (tb, D) f32; gamma/beta: (1, D) f32
    mean = jnp.mean(x, axis=-1, keepdims=True)
    xc = x - mean
    var = jnp.mean(xc * xc, axis=-1, keepdims=True)
    inv = jax.lax.rsqrt(var + LN_EPS)
    return xc * inv * gamma + beta


def _silu(x):
    return x * jax.nn.sigmoid(x)


def improved_probe_kernel(
    x_ref,        # (tb, D_in)       input dtype (f32)
    ln_in_ref,    # (2, D_in)  f32   rows: [gamma_in, beta_in]
    w1_ref,       # (D_in, H)  bf16
    hv_ref,       # (6, H)     f32   rows: [bb1, g1, b1n, bb2, g2, b2n]
    w2_ref,       # (H, H)     bf16
    w3_ref,       # (H, Dop)   bf16  (lane-padded)
    bb3_ref,      # (1, Dop)   f32   (lane-padded)
    o_ref,        # (tb, Dop)
):
    mxu_dtype = w1_ref.dtype
    x = x_ref[...].astype(jnp.float32)

    # LayerNorm(input_size)
    h = _layer_norm(x, ln_in_ref[0:1, :], ln_in_ref[1:2, :])

    # fc1 + SiLU + LayerNorm1  (+ dropout == identity in eval)
    h = jnp.dot(h.astype(mxu_dtype), w1_ref[...],
                preferred_element_type=jnp.float32) + hv_ref[0:1, :]
    h = _silu(h)
    h = _layer_norm(h, hv_ref[1:2, :], hv_ref[2:3, :])

    # fc2 + SiLU + LayerNorm2  (+ dropout == identity in eval)
    h = jnp.dot(h.astype(mxu_dtype), w2_ref[...],
                preferred_element_type=jnp.float32) + hv_ref[3:4, :]
    h = _silu(h)
    h = _layer_norm(h, hv_ref[4:5, :], hv_ref[5:6, :])

    # fc3 (lane-padded output)
    out = jnp.dot(h.astype(mxu_dtype), w3_ref[...],
                  preferred_element_type=jnp.float32) + bb3_ref[...]
    o_ref[...] = out.astype(o_ref.dtype)


def _choose_tile_b(B, D_in, H, D_out_p):
    """Pick the largest batch tile that fits a conservative VMEM budget,
    while keeping the grid length >= 2 (v7x has two TensorCores)."""
    # Bytes that scale with tile_b (f32): double-buffered x and out tiles,
    # plus a few live (tile_b, H) intermediates inside the body.
    bytes_per_row = 4 * (2 * D_in + 2 * D_out_p + 4 * H)
    # Weights are resident (double-buffered bf16); take them off the budget.
    weight_bytes = 2 * 2 * (D_in * H + H * H + H * D_out_p)
    budget = max(1 << 20, (12 << 20) - weight_bytes)   # fits v5e's 16 MiB default too
    cap = max(8, budget // bytes_per_row)
    if cap >= 128:
        cap = (cap // 128) * 128          # prefer MXU/lane-friendly multiples of 128
    else:
        cap = max(8, (cap // 8) * 8)
    cap = min(cap, 1024)
    # Keep at least 2 grid steps so dimension_semantics=("parallel",) can shard
    # the batch across both TensorCores on v7x.
    half = max(8, _round_up(pl.cdiv(B, 2), 8))
    return max(8, min(cap, half))


def improved_probe(x, params, *, tile_b=None, mxu_dtype=jnp.bfloat16):
    """x: (B, D_in) float32. params: dict of pre-transposed (in, out) weights."""
    B, D_in = x.shape
    H = params["w1"].shape[1]
    D_out = params["w3"].shape[1]
    D_out_p = _round_up(max(D_out, 128), 128)   # lane-dense output stores

    if tile_b is None:
        tile_b = _choose_tile_b(B, D_in, H, D_out_p)
    grid = pl.cdiv(B, tile_b)
    Bp = grid * tile_b
    xp = x if Bp == B else jnp.pad(x, ((0, Bp - B), (0, 0)))

    # --- pack / cast parameters (cheap; constant-folds under jit) ---
    ln_in = jnp.concatenate([params["g_in"], params["b_in"]], axis=0)            # (2, D_in)
    hv = jnp.concatenate([params["bb1"], params["g1"], params["b1n"],
                          params["bb2"], params["g2"], params["b2n"]], axis=0)   # (6, H)
    w1 = params["w1"].astype(mxu_dtype)
    w2 = params["w2"].astype(mxu_dtype)
    w3 = jnp.pad(params["w3"].astype(mxu_dtype), ((0, 0), (0, D_out_p - D_out)))
    bb3 = jnp.pad(params["bb3"], ((0, 0), (0, D_out_p - D_out)))

    full = lambda shape: pl.BlockSpec(shape, lambda i: (0, 0))

    out = pl.pallas_call(
        improved_probe_kernel,
        out_shape=jax.ShapeDtypeStruct((Bp, D_out_p), x.dtype),
        grid_spec=pltpu.PrefetchScalarGridSpec(
            num_scalar_prefetch=0,
            grid=(grid,),
            in_specs=[
                pl.BlockSpec((tile_b, D_in), lambda i: (i, 0)),   # x tile
                full((2, D_in)),          # input LN gamma/beta (packed)
                full((D_in, H)),          # fc1 weight (bf16)
                full((6, H)),             # bb1, g1, b1n, bb2, g2, b2n (packed)
                full((H, H)),             # fc2 weight (bf16)
                full((H, D_out_p)),       # fc3 weight (bf16, lane-padded)
                full((1, D_out_p)),       # fc3 bias (lane-padded)
            ],
            out_specs=pl.BlockSpec((tile_b, D_out_p), lambda i: (i, 0)),
        ),
        compiler_params=pltpu.CompilerParams(
            dimension_semantics=("parallel",),
            vmem_limit_bytes=32 * 1024 * 1024,
        ),
    )(xp, ln_in, w1, hv, w2, w3, bb3)

    return out[:B, :D_out]


def init_params(key, input_size, output_size, hidden_size):
    """Deterministic init. Linear weights stored as (in, out) == W.T of PyTorch."""
    ks = jax.random.split(key, 6)

    def linear(kw, kb, fan_in, fan_out):
        bound = 1.0 / jnp.sqrt(fan_in)
        w = jax.random.uniform(kw, (fan_in, fan_out), jnp.float32, -bound, bound)
        b = jax.random.uniform(kb, (1, fan_out), jnp.float32, -bound, bound)
        return w, b

    w1, bb1 = linear(ks[0], ks[1], input_size, hidden_size)
    w2, bb2 = linear(ks[2], ks[3], hidden_size, hidden_size)
    w3, bb3 = linear(ks[4], ks[5], hidden_size, output_size)

    return dict(
        g_in=jnp.ones((1, input_size), jnp.float32),
        b_in=jnp.zeros((1, input_size), jnp.float32),
        w1=w1, bb1=bb1,
        g1=jnp.ones((1, hidden_size), jnp.float32),
        b1n=jnp.zeros((1, hidden_size), jnp.float32),
        w2=w2, bb2=bb2,
        g2=jnp.ones((1, hidden_size), jnp.float32),
        b2n=jnp.zeros((1, hidden_size), jnp.float32),
        w3=w3, bb3=bb3,
    )


def improved_probe_ref(x, p, *, mxu_dtype=jnp.bfloat16):
    """Pure-JAX reference mirroring the kernel numerics (eval-mode dropout = identity,
    bf16 MXU operands, f32 accumulation, f32 LayerNorm/SiLU)."""
    def ln(h, g, b):
        m = jnp.mean(h, -1, keepdims=True)
        v = jnp.mean((h - m) ** 2, -1, keepdims=True)
        return (h - m) * jax.lax.rsqrt(v + LN_EPS) * g + b

    def dense(h, w, b):
        return jnp.dot(h.astype(mxu_dtype), w.astype(mxu_dtype),
                       preferred_element_type=jnp.float32) + b

    silu = lambda h: h * jax.nn.sigmoid(h)
    h = ln(x.astype(jnp.float32), p["g_in"], p["b_in"])
    h = ln(silu(dense(h, p["w1"], p["bb1"])), p["g1"], p["b1n"])
    h = ln(silu(dense(h, p["w2"], p["bb2"])), p["g2"], p["b2n"])
    return dense(h, p["w3"], p["bb3"])


if __name__ == "__main__":
    input_size, hidden_size, output_size = 32, 128, 8
    B = 20  # deliberately not a multiple of the tile: exercises cdiv grid + row padding

    key = jax.random.PRNGKey(0)
    kx, kp = jax.random.split(key)
    x = jax.random.normal(kx, (B, input_size), jnp.float32)
    params = init_params(kp, input_size, output_size, hidden_size)

    out = improved_probe(x, params)          # auto tile_b (grid >= 2)
    out = jax.block_until_ready(out)

    ref = improved_probe_ref(x, params)
    assert out.shape == (B, output_size)
    assert jnp.allclose(out, ref, atol=2e-3, rtol=2e-3), "mismatch vs reference"

    print("KERNEL_OK")
</pallas_src>

<mosaic_0001>
module attributes {stable_mosaic.version = 11 : i64} {
  func.func @improved_probe_kernel(%arg0: i32, %arg1: memref<16x32xf32, #tpu.memory_space<vmem>>, %arg2: memref<2x32xf32, #tpu.memory_space<vmem>>, %arg3: memref<32x128xbf16, #tpu.memory_space<vmem>>, %arg4: memref<6x128xf32, #tpu.memory_space<vmem>>, %arg5: memref<128x128xbf16, #tpu.memory_space<vmem>>, %arg6: memref<128x128xbf16, #tpu.memory_space<vmem>>, %arg7: memref<1x128xf32, #tpu.memory_space<vmem>>, %arg8: memref<16x128xf32, #tpu.memory_space<vmem>>) attributes {dimension_semantics = [#tpu.dimension_semantics<parallel>], iteration_bounds = array<i64: 2>, scalar_prefetch = 0 : i64, scratch_operands = 0 : i64, tpu.core_type = #tpu.core_type<tc>, window_params = [{transform_indices = @transform_0, window_bounds = array<i64: 16, 32>}, {pipeline_mode = #tpu.pipeline_mode<synchronous>, transform_indices = @transform_1, window_bounds = array<i64: 2, 32>}, {pipeline_mode = #tpu.pipeline_mode<synchronous>, transform_indices = @transform_2, window_bounds = array<i64: 32, 128>}, {pipeline_mode = #tpu.pipeline_mode<synchronous>, transform_indices = @transform_3, window_bounds = array<i64: 6, 128>}, {pipeline_mode = #tpu.pipeline_mode<synchronous>, transform_indices = @transform_4, window_bounds = array<i64: 128, 128>}, {pipeline_mode = #tpu.pipeline_mode<synchronous>, transform_indices = @transform_5, window_bounds = array<i64: 128, 128>}, {pipeline_mode = #tpu.pipeline_mode<synchronous>, transform_indices = @transform_6, window_bounds = array<i64: 1, 128>}, {transform_indices = @transform_7, window_bounds = array<i64: 16, 128>}]} {
    %c0 = arith.constant 0 : index
    %c0_0 = arith.constant 0 : index
    %0 = vector.load %arg1[%c0, %c0_0] : memref<16x32xf32, #tpu.memory_space<vmem>>, vector<16x32xf32>
    %c0_1 = arith.constant 0 : index
    %c0_2 = arith.constant 0 : index
    %1 = vector.load %arg2[%c0_1, %c0_2] : memref<2x32xf32, #tpu.memory_space<vmem>>, vector<1x32xf32>
    %c1 = arith.constant 1 : index
    %c0_3 = arith.constant 0 : index
    %2 = vector.load %arg2[%c1, %c0_3] : memref<2x32xf32, #tpu.memory_space<vmem>>, vector<1x32xf32>
    %cst = arith.constant dense<0.000000e+00> : vector<16xf32>
    %3 = vector.multi_reduction <add>, %0, %cst [1] : vector<16x32xf32> to vector<16xf32>
    %4 = vector.shape_cast %3 : vector<16xf32> to vector<16x1xf32>
    %cst_4 = arith.constant 3.200000e+01 : f32
    %5 = vector.broadcast %cst_4 : f32 to vector<16x1xf32>
    %6 = arith.divf %4, %5 : vector<16x1xf32>
    %7 = vector.broadcast %6 : vector<16x1xf32> to vector<16x32xf32>
    %8 = arith.subf %0, %7 : vector<16x32xf32>
    %9 = arith.mulf %8, %8 : vector<16x32xf32>
    %cst_5 = arith.constant dense<0.000000e+00> : vector<16xf32>
    %10 = vector.multi_reduction <add>, %9, %cst_5 [1] : vector<16x32xf32> to vector<16xf32>
    %11 = vector.shape_cast %10 : vector<16xf32> to vector<16x1xf32>
    %cst_6 = arith.constant 3.200000e+01 : f32
    %12 = vector.broadcast %cst_6 : f32 to vector<16x1xf32>
    %13 = arith.divf %11, %12 : vector<16x1xf32>
    %cst_7 = arith.constant 9.99999974E-6 : f32
    %14 = vector.broadcast %cst_7 : f32 to vector<16x1xf32>
    %15 = arith.addf %13, %14 : vector<16x1xf32>
    %16 = math.rsqrt %15 : vector<16x1xf32>
    %17 = vector.broadcast %16 : vector<16x1xf32> to vector<16x32xf32>
    %18 = arith.mulf %8, %17 : vector<16x32xf32>
    %19 = vector.broadcast %1 : vector<1x32xf32> to vector<16x32xf32>
    %20 = arith.mulf %18, %19 : vector<16x32xf32>
    %21 = vector.broadcast %2 : vector<1x32xf32> to vector<16x32xf32>
    %22 = arith.addf %20, %21 : vector<16x32xf32>
    %23 = arith.truncf %22 : vector<16x32xf32> to vector<16x32xbf16>
    %c0_8 = arith.constant 0 : index
    %c0_9 = arith.constant 0 : index
    %24 = vector.load %arg3[%c0_8, %c0_9] : memref<32x128xbf16, #tpu.memory_space<vmem>>, vector<32x128xbf16>
    %cst_10 = arith.constant dense<0.000000e+00> : vector<16x128xf32>
    %25 = tpu.matmul %23, %24, %cst_10 {dimension_numbers = #tpu.dot_dimension_numbers<[1], [0], [0], [1], [0, 0, 1, 1], [], []>} : vector<16x32xbf16>, vector<32x128xbf16>, vector<16x128xf32> -> vector<16x128xf32>
    %c0_11 = arith.constant 0 : index
    %c0_12 = arith.constant 0 : index
    %26 = vector.load %arg4[%c0_11, %c0_12] : memref<6x128xf32, #tpu.memory_space<vmem>>, vector<1x128xf32>
    %27 = vector.broadcast %26 : vector<1x128xf32> to vector<16x128xf32>
    %28 = arith.addf %25, %27 : vector<16x128xf32>
    %29 = arith.negf %28 : vector<16x128xf32>
    %30 = math.exp %29 : vector<16x128xf32>
    %cst_13 = arith.constant 1.000000e+00 : f32
    %31 = vector.broadcast %cst_13 : f32 to vector<16x128xf32>
    %32 = arith.addf %31, %30 : vector<16x128xf32>
    %33 = arith.divf %31, %32 : vector<16x128xf32>
    %34 = arith.mulf %28, %33 : vector<16x128xf32>
    %c1_14 = arith.constant 1 : index
    %c0_15 = arith.constant 0 : index
    %35 = vector.load %arg4[%c1_14, %c0_15] : memref<6x128xf32, #tpu.memory_space<vmem>>, vector<1x128xf32>
    %c2 = arith.constant 2 : index
    %c0_16 = arith.constant 0 : index
    %36 = vector.load %arg4[%c2, %c0_16] : memref<6x128xf32, #tpu.memory_space<vmem>>, vector<1x128xf32>
    %cst_17 = arith.constant dense<0.000000e+00> : vector<16xf32>
    %37 = vector.multi_reduction <add>, %34, %cst_17 [1] : vector<16x128xf32> to vector<16xf32>
    %38 = vector.shape_cast %37 : vector<16xf32> to vector<16x1xf32>
    %cst_18 = arith.constant 1.280000e+02 : f32
    %39 = vector.broadcast %cst_18 : f32 to vector<16x1xf32>
    %40 = arith.divf %38, %39 : vector<16x1xf32>
    %41 = vector.broadcast %40 : vector<16x1xf32> to vector<16x128xf32>
    %42 = arith.subf %34, %41 : vector<16x128xf32>
    %43 = arith.mulf %42, %42 : vector<16x128xf32>
    %cst_19 = arith.constant dense<0.000000e+00> : vector<16xf32>
    %44 = vector.multi_reduction <add>, %43, %cst_19 [1] : vector<16x128xf32> to vector<16xf32>
    %45 = vector.shape_cast %44 : vector<16xf32> to vector<16x1xf32>
    %cst_20 = arith.constant 1.280000e+02 : f32
    %46 = vector.broadcast %cst_20 : f32 to vector<16x1xf32>
    %47 = arith.divf %45, %46 : vector<16x1xf32>
    %cst_21 = arith.constant 9.99999974E-6 : f32
    %48 = vector.broadcast %cst_21 : f32 to vector<16x1xf32>
    %49 = arith.addf %47, %48 : vector<16x1xf32>
    %50 = math.rsqrt %49 : vector<16x1xf32>
    %51 = vector.broadcast %50 : vector<16x1xf32> to vector<16x128xf32>
    %52 = arith.mulf %42, %51 : vector<16x128xf32>
    %53 = vector.broadcast %35 : vector<1x128xf32> to vector<16x128xf32>
    %54 = arith.mulf %52, %53 : vector<16x128xf32>
    %55 = vector.broadcast %36 : vector<1x128xf32> to vector<16x128xf32>
    %56 = arith.addf %54, %55 : vector<16x128xf32>
    %57 = arith.truncf %56 : vector<16x128xf32> to vector<16x128xbf16>
    %c0_22 = arith.constant 0 : index
    %c0_23 = arith.constant 0 : index
    %58 = vector.load %arg5[%c0_22, %c0_23] : memref<128x128xbf16, #tpu.memory_space<vmem>>, vector<128x128xbf16>
    %cst_24 = arith.constant dense<0.000000e+00> : vector<16x128xf32>
    %59 = tpu.matmul %57, %58, %cst_24 {dimension_numbers = #tpu.dot_dimension_numbers<[1], [0], [0], [1], [0, 0, 1, 1], [], []>} : vector<16x128xbf16>, vector<128x128xbf16>, vector<16x128xf32> -> vector<16x128xf32>
    %c3 = arith.constant 3 : index
    %c0_25 = arith.constant 0 : index
    %60 = vector.load %arg4[%c3, %c0_25] : memref<6x128xf32, #tpu.memory_space<vmem>>, vector<1x128xf32>
    %61 = vector.broadcast %60 : vector<1x128xf32> to vector<16x128xf32>
    %62 = arith.addf %59, %61 : vector<16x128xf32>
    %63 = arith.negf %62 : vector<16x128xf32>
    %64 = math.exp %63 : vector<16x128xf32>
    %cst_26 = arith.constant 1.000000e+00 : f32
    %65 = vector.broadcast %cst_26 : f32 to vector<16x128xf32>
    %66 = arith.addf %65, %64 : vector<16x128xf32>
    %67 = arith.divf %65, %66 : vector<16x128xf32>
    %68 = arith.mulf %62, %67 : vector<16x128xf32>
    %c4 = arith.constant 4 : index
    %c0_27 = arith.constant 0 : index
    %69 = vector.load %arg4[%c4, %c0_27] : memref<6x128xf32, #tpu.memory_space<vmem>>, vector<1x128xf32>
    %c5 = arith.constant 5 : index
    %c0_28 = arith.constant 0 : index
    %70 = vector.load %arg4[%c5, %c0_28] : memref<6x128xf32, #tpu.memory_space<vmem>>, vector<1x128xf32>
    %cst_29 = arith.constant dense<0.000000e+00> : vector<16xf32>
    %71 = vector.multi_reduction <add>, %68, %cst_29 [1] : vector<16x128xf32> to vector<16xf32>
    %72 = vector.shape_cast %71 : vector<16xf32> to vector<16x1xf32>
    %cst_30 = arith.constant 1.280000e+02 : f32
    %73 = vector.broadcast %cst_30 : f32 to vector<16x1xf32>
    %74 = arith.divf %72, %73 : vector<16x1xf32>
    %75 = vector.broadcast %74 : vector<16x1xf32> to vector<16x128xf32>
    %76 = arith.subf %68, %75 : vector<16x128xf32>
    %77 = arith.mulf %76, %76 : vector<16x128xf32>
    %cst_31 = arith.constant dense<0.000000e+00> : vector<16xf32>
    %78 = vector.multi_reduction <add>, %77, %cst_31 [1] : vector<16x128xf32> to vector<16xf32>
    %79 = vector.shape_cast %78 : vector<16xf32> to vector<16x1xf32>
    %cst_32 = arith.constant 1.280000e+02 : f32
    %80 = vector.broadcast %cst_32 : f32 to vector<16x1xf32>
    %81 = arith.divf %79, %80 : vector<16x1xf32>
    %cst_33 = arith.constant 9.99999974E-6 : f32
    %82 = vector.broadcast %cst_33 : f32 to vector<16x1xf32>
    %83 = arith.addf %81, %82 : vector<16x1xf32>
    %84 = math.rsqrt %83 : vector<16x1xf32>
    %85 = vector.broadcast %84 : vector<16x1xf32> to vector<16x128xf32>
    %86 = arith.mulf %76, %85 : vector<16x128xf32>
    %87 = vector.broadcast %69 : vector<1x128xf32> to vector<16x128xf32>
    %88 = arith.mulf %86, %87 : vector<16x128xf32>
    %89 = vector.broadcast %70 : vector<1x128xf32> to vector<16x128xf32>
    %90 = arith.addf %88, %89 : vector<16x128xf32>
    %91 = arith.truncf %90 : vector<16x128xf32> to vector<16x128xbf16>
    %c0_34 = arith.constant 0 : index
    %c0_35 = arith.constant 0 : index
    %92 = vector.load %arg6[%c0_34, %c0_35] : memref<128x128xbf16, #tpu.memory_space<vmem>>, vector<128x128xbf16>
    %cst_36 = arith.constant dense<0.000000e+00> : vector<16x128xf32>
    %93 = tpu.matmul %91, %92, %cst_36 {dimension_numbers = #tpu.dot_dimension_numbers<[1], [0], [0], [1], [0, 0, 1, 1], [], []>} : vector<16x128xbf16>, vector<128x128xbf16>, vector<16x128xf32> -> vector<16x128xf32>
    %c0_37 = arith.constant 0 : index
    %c0_38 = arith.constant 0 : index
    %94 = vector.load %arg7[%c0_37, %c0_38] : memref<1x128xf32, #tpu.memory_space<vmem>>, vector<1x128xf32>
    %95 = vector.broadcast %94 : vector<1x128xf32> to vector<16x128xf32>
    %96 = arith.addf %93, %95 : vector<16x128xf32>
    %c0_39 = arith.constant 0 : index
    %c0_40 = arith.constant 0 : index
    %97 = vector.load %arg8[%c0_39, %c0_40] : memref<16x128xf32, #tpu.memory_space<vmem>>, vector<16x128xf32>
    tpu.vector_store %arg8[%c0_39, %c0_40], %96 {strides = array<i32>} : memref<16x128xf32, #tpu.memory_space<vmem>>, vector<16x128xf32>,
    return
  }
  func.func @transform_0(%arg0: i32) -> (i32, i32) {
    %c0_i32 = arith.constant 0 : i32
    %c0_i32_0 = arith.constant 0 : i32
    return %arg0, %c0_i32 : i32, i32
  }
  func.func @transform_1(%arg0: i32) -> (i32, i32) {
    %c0_i32 = arith.constant 0 : i32
    %c0_i32_0 = arith.constant 0 : i32
    %c0_i32_1 = arith.constant 0 : i32
    return %c0_i32, %c0_i32_0 : i32, i32
  }
  func.func @transform_2(%arg0: i32) -> (i32, i32) {
    %c0_i32 = arith.constant 0 : i32
    %c0_i32_0 = arith.constant 0 : i32
    %c0_i32_1 = arith.constant 0 : i32
    return %c0_i32, %c0_i32_0 : i32, i32
  }
  func.func @transform_3(%arg0: i32) -> (i32, i32) {
    %c0_i32 = arith.constant 0 : i32
    %c0_i32_0 = arith.constant 0 : i32
    %c0_i32_1 = arith.constant 0 : i32
    return %c0_i32, %c0_i32_0 : i32, i32
  }
  func.func @transform_4(%arg0: i32) -> (i32, i32) {
    %c0_i32 = arith.constant 0 : i32
    %c0_i32_0 = arith.constant 0 : i32
    %c0_i32_1 = arith.constant 0 : i32
    return %c0_i32, %c0_i32_0 : i32, i32
  }
  func.func @transform_5(%arg0: i32) -> (i32, i32) {
    %c0_i32 = arith.constant 0 : i32
    %c0_i32_0 = arith.constant 0 : i32
    %c0_i32_1 = arith.constant 0 : i32
    return %c0_i32, %c0_i32_0 : i32, i32
  }
  func.func @transform_6(%arg0: i32) -> (i32, i32) {
    %c0_i32 = arith.constant 0 : i32
    %c0_i32_0 = arith.constant 0 : i32
    %c0_i32_1 = arith.constant 0 : i32
    return %c0_i32, %c0_i32_0 : i32, i32
  }
  func.func @transform_7(%arg0: i32) -> (i32, i32) {
    %c0_i32 = arith.constant 0 : i32
    %c0_i32_0 = arith.constant 0 : i32
    return %arg0, %c0_i32 : i32, i32
  }
}

</mosaic_0001>

<llo_original>
// kernel: tpu_custom_call.1
$region0: #{tpu_custom_call.1}
  #allocation0 [shape = 'u32[]', space=smem, size = 0x4, offset = 0x4, fixed_abs, tag = 'smem constant byte address 0x4 - core index']
  #allocation1 [shape = 'u32[72,128]{1,0:T(1,128)}', space=vmem, size = 0x9000, scoped, tag = 'internal scratch']
  %s0 = inlined_call_operand.hbm [shape: f32[32,32], index: 0, kind: input, shape index: {}]
  %s1 = inlined_call_operand.hbm [shape: f32[2,32], index: 1, kind: input, shape index: {}]
  %s2 = inlined_call_operand.hbm [shape: bf16[32,128], index: 2, kind: input, shape index: {}]
  %s3 = inlined_call_operand.hbm [shape: f32[6,128], index: 3, kind: input, shape index: {}]
  %s4 = inlined_call_operand.hbm [shape: bf16[128,128], index: 4, kind: input, shape index: {}]
  %s5 = inlined_call_operand.hbm [shape: bf16[128,128], index: 5, kind: input, shape index: {}]
  %s6 = inlined_call_operand.vmem [shape: f32[1,128], index: 6, kind: input, shape index: {}]
  %s7 = inlined_call_operand.hbm [shape: f32[32,128], index: 7, kind: output, shape index: {}]
  %s8 = sld [smem:[#allocation0]]
  $region85: #{tpu_custom_call.1} parent=0
    _
  %s10 = ssub.s32 1, %s8
  %s11 = scalar_select 0, %s10, %s8
  $region1: #{tpu_custom_call.1} parent=0
    #allocation2 [shape = 'u8[16384]{0}', space=vmem, size = 0x4000, scoped, tag = 'input window, operand 0']
    #allocation3 [shape = 's32[2]{0}', space=sflag, size = 0x8, scoped, tag = 'scoped memory for tpu_custom_call.1']
    #allocation4 [shape = 's32[2]{0}', space=sflag, size = 0x8, scoped, tag = 'scoped memory for tpu_custom_call.1']
    #allocation5 [shape = 'u8[1024]{0}', space=vmem, size = 0x400, scoped, tag = 'input window, operand 1, single buffered']
    #allocation6 [shape = 's32[1]{0}', space=sflag, size = 0x4, scoped, tag = 'scoped memory for tpu_custom_call.1']
    #allocation7 [shape = 'u8[8192]{0}', space=vmem, size = 0x2000, scoped, tag = 'input window, operand 2, single buffered']
    #allocation8 [shape = 'u8[4096]{0}', space=vmem, size = 0x1000, scoped, tag = 'input window, operand 3, single buffered']
    #allocation9 [shape = 's32[1]{0}', space=sflag, size = 0x4, scoped, tag = 'scoped memory for tpu_custom_call.1']
    #allocation10 [shape = 'u8[32768]{0}', space=vmem, size = 0x8000, scoped, tag = 'input window, operand 4, single buffered']
    #allocation11 [shape = 'u8[32768]{0}', space=vmem, size = 0x8000, scoped, tag = 'input window, operand 5, single buffered']
    #allocation12 [shape = 's32[1]{0}', space=sflag, size = 0x4, scoped, tag = 'scoped memory for tpu_custom_call.1']
    #allocation13 [shape = 'u8[16384]{0}', space=vmem, size = 0x4000, scoped, tag = 'output window, operand 0']
    %12 = vsyncpa [#allocation3], 0
    %s13 = scalar_lea.sflag [#allocation3], 1
    %14 = vsyncpa %s13, 0
    %15 = vsyncpa [#allocation6], 0
    %16 = vsyncpa [#allocation9], 0
    %17 = vsyncpa [#allocation12], 0
    %18 = vsyncpa [#allocation4], 0
    %s19 = scalar_lea.sflag [#allocation4], 1
    %20 = vsyncpa %s19, 0
    loop: start=0, step=1, limit=4
    $region2: #{tpu_custom_call.1} parent=1 // loop_pre_header
      _
    $region3: #{tpu_custom_call.1} parent=1 // loop_header
      %s22 = sphi 0, %s26
      %p23 = scmp.ge.s32.totalorder %s22, 4
      %s32 = sphi 0, %s34
      %s35 = sphi 0, %s32
      %s36 = sphi 0, %s35
      %s52 = sphi 0, %s36
      %s56 = sphi 0, %s56
      %s58 = sphi 0, %s56
      %s59 = sphi 0, %s58
      %s73 = sphi 0, %s59
      %s77 = sphi 0, %s77
      %s79 = sphi 0, %s77
      %s80 = sphi 0, %s79
      %s94 = sphi 0, %s80
      %s98 = sphi 0, %s98
      %s100 = sphi 0, %s98
      %s101 = sphi 0, %s100
      %s115 = sphi 0, %s101
      %s119 = sphi 0, %s119
      %s121 = sphi 0, %s119
      %s122 = sphi 0, %s121
      %s136 = sphi 0, %s122
      %s140 = sphi 0, %s140
      %s142 = sphi 0, %s140
      %s143 = sphi 0, %s142
      %s157 = sphi 0, %s143
      %s161 = sphi 0, %s161
      %s163 = sphi 0, %s161
      %s164 = sphi 0, %s163
      %s178 = sphi 0, %s164
      %s184 = sphi 0, %s186
      %s187 = sphi 0, %s184
      %s188 = sphi 0, %s187
      %s204 = sphi 0, %s188
    $region4: #{tpu_custom_call.1} parent=1 // loop_header_branch
      %25 = sbr.rel (%p23) target = $region8
    $region5: #{tpu_custom_call.1} parent=1 // loop_body
      %s27 = ssub.s32 %s22, 1
      %s28 = ssub.s32 %s22, 2
      %s29 = sadd.s32 %s22, 1
      %s30 = ssub.s32 %s22, %s29
      %p31 = scmp.eq.s32.totalorder %s30, 0
      %s33 = sadd.s32 %s32, 1
      %s34 = scalar_select %p31, %s32, %s33
      %p37 = pneg %p31
      %p38 = scmp.eq.s32.totalorder %s22, 1
      %p39 = por %p37, %p38
      %p40 = scmp.ne.s32.totalorder %s32, %s35
      %p41 = scmp.eq.s32.totalorder %s22, 0
      %p42 = por %p40, %p41
      %p43 = scmp.ne.s32.totalorder %s32, %s35
      %p44 = scmp.eq.s32.totalorder %s27, 1
      %p45 = por %p43, %p44
      %p46 = scmp.ne.s32.totalorder %s35, %s36
      %p47 = scmp.eq.s32.totalorder %s27, 0
      %p48 = por %p46, %p47
      %p49 = scmp.ne.s32.totalorder %s35, %s36
      %p50 = scmp.eq.s32.totalorder %s28, 1
      %p51 = por %p49, %p50
      %p53 = scmp.ne.s32.totalorder %s36, %s52
      %p54 = scmp.eq.s32.totalorder %s28, 0
      %p55 = por %p53, %p54
      %s57 = sadd.s32 %s56, 1
      %p60 = scmp.eq.s32.totalorder %s22, 1
      %p61 = scmp.ne.s32.totalorder %s56, %s58
      %p62 = scmp.eq.s32.totalorder %s22, 0
      %p63 = por %p61, %p62
      %p64 = scmp.ne.s32.totalorder %s56, %s58
      %p65 = scmp.eq.s32.totalorder %s27, 1
      %p66 = por %p64, %p65
      %p67 = scmp.ne.s32.totalorder %s58, %s59
      %p68 = scmp.eq.s32.totalorder %s27, 0
      %p69 = por %p67, %p68
      %p70 = scmp.ne.s32.totalorder %s58, %s59
      %p71 = scmp.eq.s32.totalorder %s28, 1
      %p72 = por %p70, %p71
      %p74 = scmp.ne.s32.totalorder %s59, %s73
      %p75 = scmp.eq.s32.totalorder %s28, 0
      %p76 = por %p74, %p75
      %s78 = sadd.s32 %s77, 1
      %p81 = scmp.eq.s32.totalorder %s22, 1
      %p82 = scmp.ne.s32.totalorder %s77, %s79
      %p83 = scmp.eq.s32.totalorder %s22, 0
      %p84 = por %p82, %p83
      %p85 = scmp.ne.s32.totalorder %s77, %s79
      %p86 = scmp.eq.s32.totalorder %s27, 1
      %p87 = por %p85, %p86
      %p88 = scmp.ne.s32.totalorder %s79, %s80
      %p89 = scmp.eq.s32.totalorder %s27, 0
      %p90 = por %p88, %p89
      %p91 = scmp.ne.s32.totalorder %s79, %s80
      %p92 = scmp.eq.s32.totalorder %s28, 1
      %p93 = por %p91, %p92
      %p95 = scmp.ne.s32.totalorder %s80, %s94
      %p96 = scmp.eq.s32.totalorder %s28, 0
      %p97 = por %p95, %p96
      %s99 = sadd.s32 %s98, 1
      %p102 = scmp.eq.s32.totalorder %s22, 1
      %p103 = scmp.ne.s32.totalorder %s98, %s100
      %p104 = scmp.eq.s32.totalorder %s22, 0
      %p105 = por %p103, %p104
      %p106 = scmp.ne.s32.totalorder %s98, %s100
      %p107 = scmp.eq.s32.totalorder %s27, 1
      %p108 = por %p106, %p107
      %p109 = scmp.ne.s32.totalorder %s100, %s101
      %p110 = scmp.eq.s32.totalorder %s27, 0
      %p111 = por %p109, %p110
      %p112 = scmp.ne.s32.totalorder %s100, %s101
      %p113 = scmp.eq.s32.totalorder %s28, 1
      %p114 = por %p112, %p113
      %p116 = scmp.ne.s32.totalorder %s101, %s115
      %p117 = scmp.eq.s32.totalorder %s28, 0
      %p118 = por %p116, %p117
      %s120 = sadd.s32 %s119, 1
      %p123 = scmp.eq.s32.totalorder %s22, 1
      %p124 = scmp.ne.s32.totalorder %s119, %s121
      %p125 = scmp.eq.s32.totalorder %s22, 0
      %p126 = por %p124, %p125
      %p127 = scmp.ne.s32.totalorder %s119, %s121
      %p128 = scmp.eq.s32.totalorder %s27, 1
      %p129 = por %p127, %p128
      %p130 = scmp.ne.s32.totalorder %s121, %s122
      %p131 = scmp.eq.s32.totalorder %s27, 0
      %p132 = por %p130, %p131
      %p133 = scmp.ne.s32.totalorder %s121, %s122
      %p134 = scmp.eq.s32.totalorder %s28, 1
      %p135 = por %p133, %p134
      %p137 = scmp.ne.s32.totalorder %s122, %s136
      %p138 = scmp.eq.s32.totalorder %s28, 0
      %p139 = por %p137, %p138
      %s141 = sadd.s32 %s140, 1
      %p144 = scmp.eq.s32.totalorder %s22, 1
      %p145 = scmp.ne.s32.totalorder %s140, %s142
      %p146 = scmp.eq.s32.totalorder %s22, 0
      %p147 = por %p145, %p146
      %p148 = scmp.ne.s32.totalorder %s140, %s142
      %p149 = scmp.eq.s32.totalorder %s27, 1
      %p150 = por %p148, %p149
      %p151 = scmp.ne.s32.totalorder %s142, %s143
      %p152 = scmp.eq.s32.totalorder %s27, 0
      %p153 = por %p151, %p152
      %p154 = scmp.ne.s32.totalorder %s142, %s143
      %p155 = scmp.eq.s32.totalorder %s28, 1
      %p156 = por %p154, %p155
      %p158 = scmp.ne.s32.totalorder %s143, %s157
      %p159 = scmp.eq.s32.totalorder %s28, 0
      %p160 = por %p158, %p159
      %s162 = sadd.s32 %s161, 1
      %p165 = scmp.eq.s32.totalorder %s22, 1
      %p166 = scmp.ne.s32.totalorder %s161, %s163
      %p167 = scmp.eq.s32.totalorder %s22, 0
      %p168 = por %p166, %p167
      %p169 = scmp.ne.s32.totalorder %s161, %s163
      %p170 = scmp.eq.s32.totalorder %s27, 1
      %p171 = por %p169, %p170
      %p172 = scmp.ne.s32.totalorder %s163, %s164
      %p173 = scmp.eq.s32.totalorder %s27, 0
      %p174 = por %p172, %p173
      %p175 = scmp.ne.s32.totalorder %s163, %s164
      %p176 = scmp.eq.s32.totalorder %s28, 1
      %p177 = por %p175, %p176
      %p179 = scmp.ne.s32.totalorder %s164, %s178
      %p180 = scmp.eq.s32.totalorder %s28, 0
      %p181 = por %p179, %p180
      %s182 = ssub.s32 %s22, %s29
      %p183 = scmp.eq.s32.totalorder %s182, 0
      %s185 = sadd.s32 %s184, 1
      %s186 = scalar_select %p183, %s184, %s185
      %p189 = pneg %p183
      %p190 = scmp.eq.s32.totalorder %s22, 1
      %p191 = por %p189, %p190
      %p192 = scmp.ne.s32.totalorder %s184, %s187
      %p193 = scmp.eq.s32.totalorder %s22, 0
      %p194 = por %p192, %p193
      %p195 = scmp.ne.s32.totalorder %s184, %s187
      %p196 = scmp.eq.s32.totalorder %s27, 1
      %p197 = por %p195, %p196
      %p198 = scmp.ne.s32.totalorder %s187, %s188
      %p199 = scmp.eq.s32.totalorder %s27, 0
      %p200 = por %p198, %p199
      %p201 = scmp.ne.s32.totalorder %s187, %s188
      %p202 = scmp.eq.s32.totalorder %s28, 1
      %p203 = por %p201, %p202
      %p205 = scmp.ne.s32.totalorder %s188, %s204
      %p206 = scmp.eq.s32.totalorder %s28, 0
      %p207 = por %p205, %p206
      %p208 = scmp.le.s32.totalorder 1, %s22
      %p209 = scmp.lt.s32.totalorder %s22, 3
      %p210 = pnand %p208, %p209
      %p211 = pneg %p210
      // Predicated region
      $region9: #{tpu_custom_call.1} parent=5 // pred_check
        _
      $region10: #{tpu_custom_call.1} parent=5 // pred_check_branch
        %213 = sbr.rel (%p210) target = $region12
      $region11: #{tpu_custom_call.1} parent=5 // pred_region
        %s214 = ssub.s32 %s22, 1
        // Predicated region
        $region13: #{tpu_custom_call.1} parent=11 // pred_check
          %p215 = pneg %p69
        $region14: #{tpu_custom_call.1} parent=11 // pred_check_branch
          %217 = sbr.rel (%p215) target = $region16
        $region15: #{tpu_custom_call.1} parent=11 // pred_region
          %219 = vsyncadd [#allocation6], 0
          %s221 = sshll.u32 %s1, 4
          %s222 = int_to_ptr.hbm [resolvable:$true] %s221
          %s223 = sshll.u32 [#allocation5], 4
          %s224 = int_to_ptr.vmem [resolvable:$true] %s223
          %226 = dma.hbm_to_vmem [thread:$0]  %s222, 32, %s224, [#allocation6]
        $region16: #{tpu_custom_call.1} parent=11 // pred_fallthru
          _
        // Predicated region
        $region17: #{tpu_custom_call.1} parent=11 // pred_check
          %p227 = pneg %p90
        $region18: #{tpu_custom_call.1} parent=11 // pred_check_branch
          %229 = sbr.rel (%p227) target = $region20
        $region19: #{tpu_custom_call.1} parent=11 // pred_region
          %231 = vsyncadd [#allocation6], 0
          %s232 = sshll.u32 %s2, 4
          %s233 = int_to_ptr.hbm [resolvable:$true] %s232
          %s234 = sshll.u32 [#allocation7], 4
          %s235 = int_to_ptr.vmem [resolvable:$true] %s234
          %240 = dma.hbm_to_vmem [thread:$0]  %s233, 256, %s235, [#allocation6], 64, 64, 4
        $region20: #{tpu_custom_call.1} parent=11 // pred_fallthru
          _
        // Predicated region
        $region21: #{tpu_custom_call.1} parent=11 // pred_check
          %p241 = pneg %p111
        $region22: #{tpu_custom_call.1} parent=11 // pred_check_branch
          %243 = sbr.rel (%p241) target = $region24
        $region23: #{tpu_custom_call.1} parent=11 // pred_region
          %245 = vsyncadd [#allocation9], 0
          %s247 = sshll.u32 %s3, 4
          %s248 = int_to_ptr.hbm [resolvable:$true] %s247
          %s249 = sshll.u32 [#allocation8], 4
          %s250 = int_to_ptr.vmem [resolvable:$true] %s249
          %252 = dma.hbm_to_vmem [thread:$0]  %s248, 128, %s250, [#allocation9]
        $region24: #{tpu_custom_call.1} parent=11 // pred_fallthru
          _
        // Predicated region
        $region25: #{tpu_custom_call.1} parent=11 // pred_check
          %p253 = pneg %p132
        $region26: #{tpu_custom_call.1} parent=11 // pred_check_branch
          %255 = sbr.rel (%p253) target = $region28
        $region27: #{tpu_custom_call.1} parent=11 // pred_region
          %257 = vsyncadd [#allocation9], 0
          %s258 = sshll.u32 %s4, 4
          %s259 = int_to_ptr.hbm [resolvable:$true] %s258
          %s260 = sshll.u32 [#allocation10], 4
          %s261 = int_to_ptr.vmem [resolvable:$true] %s260
          %266 = dma.hbm_to_vmem [thread:$0]  %s259, 1024, %s261, [#allocation9], 64, 64, 4
        $region28: #{tpu_custom_call.1} parent=11 // pred_fallthru
          _
        // Predicated region
        $region29: #{tpu_custom_call.1} parent=11 // pred_check
          %p267 = pneg %p153
        $region30: #{tpu_custom_call.1} parent=11 // pred_check_branch
          %269 = sbr.rel (%p267) target = $region32
        $region31: #{tpu_custom_call.1} parent=11 // pred_region
          %271 = vsyncadd [#allocation12], 0
          %s272 = sshll.u32 %s5, 4
          %s273 = int_to_ptr.hbm [resolvable:$true] %s272
          %s274 = sshll.u32 [#allocation11], 4
          %s275 = int_to_ptr.vmem [resolvable:$true] %s274
          %280 = dma.hbm_to_vmem [thread:$0]  %s273, 1024, %s275, [#allocation12], 64, 64, 4
        $region32: #{tpu_custom_call.1} parent=11 // pred_fallthru
          _
        // Predicated region
        $region33: #{tpu_custom_call.1} parent=11 // pred_check
          %p281 = pneg %p174
        $region34: #{tpu_custom_call.1} parent=11 // pred_check_branch
          %283 = sbr.rel (%p281) target = $region36
        $region35: #{tpu_custom_call.1} parent=11 // pred_region
          _
        $region36: #{tpu_custom_call.1} parent=11 // pred_fallthru
          _
      $region12: #{tpu_custom_call.1} parent=5 // pred_fallthru
        _
      %p284 = scmp.lt.s32.totalorder %s22, 2
      // Predicated region
      $region37: #{tpu_custom_call.1} parent=5 // pred_check
        %p285 = pneg %p284
      $region38: #{tpu_custom_call.1} parent=5 // pred_check_branch
        %287 = sbr.rel (%p285) target = $region40
      $region39: #{tpu_custom_call.1} parent=5 // pred_region
        // Predicated region
        $region41: #{tpu_custom_call.1} parent=39 // pred_check
          %p288 = pneg %p42
        $region42: #{tpu_custom_call.1} parent=39 // pred_check_branch
          %290 = sbr.rel (%p288) target = $region44
        $region43: #{tpu_custom_call.1} parent=39 // pred_region
          %s291 = sand.u32 %s32, 1
          %s292 = scalar_lea.sflag [#allocation3], %s291
          %s293 = sand.u32 %s32, 1
          %s294 = smul.addr %s293, 16
          %s295 = scalar_lea.vmem [#allocation2], %s294
          %s296 = smul.u32 2, %s22
          %298 = vsyncadd %s292, 0
          %s299 = smul.addr %s296, 8
          %s300 = scalar_lea.hbm %s0, %s299
          %s301 = sshll.u32 %s300, 4
          %s302 = int_to_ptr.hbm [resolvable:$true] %s301
          %s303 = sshll.u32 %s295, 4
          %s304 = int_to_ptr.vmem [resolvable:$true] %s303
          %309 = dma.hbm_to_vmem [thread:$0]  %s302, 256, %s304, %s292, 128, 128, 8
        $region44: #{tpu_custom_call.1} parent=39 // pred_fallthru
          _
      $region40: #{tpu_custom_call.1} parent=5 // pred_fallthru
        _
      %p310 = scmp.le.s32.totalorder 1, %s22
      %p311 = scmp.lt.s32.totalorder %s22, 3
      %p312 = pnand %p310, %p311
      %p313 = pneg %p312
      // Predicated region
      $region45: #{tpu_custom_call.1} parent=5 // pred_check
        _
      $region46: #{tpu_custom_call.1} parent=5 // pred_check_branch
        %315 = sbr.rel (%p312) target = $region48
      $region47: #{tpu_custom_call.1} parent=5 // pred_region
        %s316 = ssub.s32 %s22, 1
        %s317 = sand.u32 %s35, 1
        %s318 = scalar_lea.sflag [#allocation3], %s317
        %s319 = sand.u32 %s35, 1
        %s320 = smul.addr %s319, 16
        %s321 = scalar_lea.vmem [#allocation2], %s320
        // Predicated region
        $region49: #{tpu_custom_call.1} parent=47 // pred_check
          %p322 = pneg %p48
        $region50: #{tpu_custom_call.1} parent=47 // pred_check_branch
          %324 = sbr.rel (%p322) target = $region52
        $region51: #{tpu_custom_call.1} parent=47 // pred_region
          %326 = dma.done %s318, 256
        $region52: #{tpu_custom_call.1} parent=47 // pred_fallthru
          _
        // Predicated region
        $region53: #{tpu_custom_call.1} parent=47 // pred_check
          %p327 = pneg %p69
        $region54: #{tpu_custom_call.1} parent=47 // pred_check_branch
          %329 = sbr.rel (%p327) target = $region56
        $region55: #{tpu_custom_call.1} parent=47 // pred_region
          %331 = dma.done [#allocation6], 32
        $region56: #{tpu_custom_call.1} parent=47 // pred_fallthru
          _
        // Predicated region
        $region57: #{tpu_custom_call.1} parent=47 // pred_check
          %p332 = pneg %p90
        $region58: #{tpu_custom_call.1} parent=47 // pred_check_branch
          %334 = sbr.rel (%p332) target = $region60
        $region59: #{tpu_custom_call.1} parent=47 // pred_region
          %336 = dma.done [#allocation6], 256
        $region60: #{tpu_custom_call.1} parent=47 // pred_fallthru
          _
        // Predicated region
        $region61: #{tpu_custom_call.1} parent=47 // pred_check
          %p337 = pneg %p111
        $region62: #{tpu_custom_call.1} parent=47 // pred_check_branch
          %339 = sbr.rel (%p337) target = $region64
        $region63: #{tpu_custom_call.1} parent=47 // pred_region
          %341 = dma.done [#allocation9], 128
        $region64: #{tpu_custom_call.1} parent=47 // pred_fallthru
          _
        // Predicated region
        $region65: #{tpu_custom_call.1} parent=47 // pred_check
          %p342 = pneg %p132
        $region66: #{tpu_custom_call.1} parent=47 // pred_check_branch
          %344 = sbr.rel (%p342) target = $region68
        $region67: #{tpu_custom_call.1} parent=47 // pred_region
          %346 = dma.done [#allocation9], 1024
        $region68: #{tpu_custom_call.1} parent=47 // pred_fallthru
          _
        // Predicated region
        $region69: #{tpu_custom_call.1} parent=47 // pred_check
          %p347 = pneg %p153
        $region70: #{tpu_custom_call.1} parent=47 // pred_check_branch
          %349 = sbr.rel (%p347) target = $region72
        $region71: #{tpu_custom_call.1} parent=47 // pred_region
          %351 = dma.done [#allocation12], 1024
        $region72: #{tpu_custom_call.1} parent=47 // pred_fallthru
          _
        %s352 = sand.u32 %s35, 1
        %s353 = scalar_lea.sflag [#allocation3], %s352
        %s354 = sand.u32 %s35, 1
        %s355 = smul.addr %s354, 16
        %s356 = scalar_lea.vmem [#allocation2], %s355
        %p357 = pneg %p48
        %p358 = pneg %p45
        %p359 = pneg %p69
        %p360 = pneg %p66
        %p361 = pneg %p90
        %p362 = pneg %p87
        %p363 = pneg %p111
        %p364 = pneg %p108
        %p365 = pneg %p132
        %p366 = pneg %p129
        %p367 = pneg %p153
        %p368 = pneg %p150
        %p369 = pneg %p174
        %p370 = pneg %p171
        %p371 = pneg %p200
        %p372 = pneg %p197
        %s373 = sand.u32 %s187, 1
        %s374 = scalar_lea.sflag [#allocation4], %s373
        %s375 = sand.u32 %s187, 1
        %s376 = smul.addr %s375, 16
        %s377 = scalar_lea.vmem [#allocation13], %s376
        %s378 = smul.u32 2, %s27
        %s379 = smul.u32 2, %s27
        %v381 = vld [vmem:[%s321] sm:$0xff]
        %v382 = vld [vmem:[%s321 + $0x8] sm:$0xff]
        %v383 = vld [vmem:[#allocation5] sm:$0x1]
        %v384 = vld [vmem:[#allocation5 + $0x1] sm:$0x1]
        %vm385 = vcmask 261120
        %v386 = vsel %vm385, %v381, 0.0
        %387 = vadd.xlane.f32.xlu0 %v386
        %v388 = vpop.xlane.xlu0 %387
        %v389 = vsel %vm385, %v382, 0.0
        %390 = vadd.xlane.f32.xlu0 %v389
        %v391 = vpop.xlane.xlu0 %390
        %v392 = vrcp.pop 32.0
        %v393 = vmul.f32 32.0, %v392
        %v394 = vsub.f32 1.0, %v393
        %v395 = vmul.f32 %v392, %v394
        %v396 = vadd.f32 %v392, %v395
        %vm397 = vweird.f32 %v392
        %v398 = vsel %vm397, %v392, %v396
        %v399 = vmul.f32 %v388, %v398
        %v400 = vmul.f32 %v391, %v398
        %v401 = vsub.f32 %v381, %v399
        %v402 = vsub.f32 %v382, %v400
        %v403 = vmul.f32 %v401, %v401
        %v404 = vmul.f32 %v402, %v402
        %v405 = vsel %vm385, %v403, 0.0
        %406 = vadd.xlane.f32.xlu0 %v405
        %v407 = vpop.xlane.xlu0 %406
        %v408 = vsel %vm385, %v404, 0.0
        %409 = vadd.xlane.f32.xlu0 %v408
        %v410 = vpop.xlane.xlu0 %409
        %v411 = vmul.f32 %v407, %v398
        %v412 = vmul.f32 %v410, %v398
        %v413 = vadd.f32 %v411, 1e-05
        %v414 = vadd.f32 %v412, 1e-05
        %v415 = vrsqrt.pop %v413
        %v416 = vmul.f32 %v415, %v413
        %v417 = vmul.f32 %v416, %v415
        %v418 = vmul.f32 0.5, %v417
        %v419 = vsub.f32 1.5, %v418
        %v420 = vmul.f32 %v415, %v419
        %vm421 = vweird.f32 %v413
        %vm422 = vweird.f32 %v415
        %vm423 = vmor %vm421, %vm422
        %v424 = vsel %vm423, %v415, %v420
        %v425 = vrsqrt.pop %v414
        %v426 = vmul.f32 %v425, %v414
        %v427 = vmul.f32 %v426, %v425
        %v428 = vmul.f32 0.5, %v427
        %v429 = vsub.f32 1.5, %v428
        %v430 = vmul.f32 %v425, %v429
        %vm431 = vweird.f32 %v414
        %vm432 = vweird.f32 %v425
        %vm433 = vmor %vm431, %vm432
        %v434 = vsel %vm433, %v425, %v430
        %v435 = vmul.f32 %v401, %v424
        %v436 = vmul.f32 %v402, %v434
        %v437 = vperm.slane %v383, 0
        %v438 = vmul.f32 %v435, %v437
        %v439 = vmul.f32 %v436, %v437
        %v440 = vperm.slane %v384, 0
        %v441 = vadd.f32 %v438, %v440
        %v442 = vadd.f32 %v439, %v440
        %v443 = vpack.c.bf16 %v442, %v441
        %v444 = vld [vmem:[#allocation7] sm:$0xf]
        %v445 = vld [vmem:[#allocation7 + $0x4] sm:$0xf]
        %v446 = vld [vmem:[#allocation7 + $0x8] sm:$0xf]
        %v447 = vld [vmem:[#allocation7 + $0xc] sm:$0xf]
        %v448 = vld [vmem:[#allocation8] sm:$0x1]
        %v449 = vperm.slane %v448, 0
        %v454 = vunpack.c.l.b16 %v444
        %v455 = vunpack.c.l.b16 %v445
        %v456 = vunpack.c.l.b16 %v446
        %v457 = vunpack.c.l.b16 %v447
        %v458 = vpack.c.b16 %v455, %v454
        %v459 = vpack.c.b16 %v457, %v456
        %v463 = vsel %vm385, %v443, 0
        %465 = vmatpush.bf16.msra.mxu0 0
        %466 = vmatpush.bf16.msra.mxu0 0
        %467 = vmatpush.bf16.msra.mxu0 0
        %468 = vmatpush.bf16.msra.mxu0 0
        %469 = vmatpush.bf16.msra.mxu0 0
        %470 = vmatpush.bf16.msra.mxu0 0
        %471 = vmatpush.bf16.msra.mxu0 %v459
        %472 = vmatpush.bf16.msra.mxu0 %v458
        %473 = vmatmul.bf16.gmra.mxu0 %v463
        %v474 = vpop.f32.mrf.mxu0
        %v475 = vadd.f32 %v449, %v474
        %v476 = vpop.f32.mrf.mxu0
        %v477 = vadd.f32 %v449, %v476
        %478 = vdwg.mxu0
        %v479 = vxor.u32 %v475, 2147483648
        %v480 = vxor.u32 %v477, 2147483648
        %v481 = vmul.f32 %v479, 1.442695
        %v482 = vpow.pop %v481
        %v483 = vmul.f32 %v480, 1.442695
        %v484 = vpow.pop %v483
        %v485 = vadd.f32 %v482, 1.0
        %v486 = vadd.f32 %v484, 1.0
        %v487 = vrcp.pop %v485
        %v488 = vmul.f32 %v485, %v487
        %v489 = vsub.f32 1.0, %v488
        %v490 = vmul.f32 %v487, %v489
        %v491 = vadd.f32 %v487, %v490
        %vm492 = vweird.f32 %v485
        %vm493 = vweird.f32 %v487
        %vm494 = vmor %vm492, %vm493
        %v495 = vsel %vm494, %v487, %v491
        %v496 = vand.u32 2147483647, %v485
        %vm497 = vcmp.eq.f32.partialorder %v496, 8.507059e+37
        %v498 = vand.u32 %v485, 2147483648
        %v499 = vor.u32 1.1754944e-38, %v498
        %v500 = vsel %vm497, %v499, %v495
        %v501 = vmul.f32 1.0, %v500
        %v502 = vrcp.pop %v486
        %v503 = vmul.f32 %v486, %v502
        %v504 = vsub.f32 1.0, %v503
        %v505 = vmul.f32 %v502, %v504
        %v506 = vadd.f32 %v502, %v505
        %vm507 = vweird.f32 %v486
        %vm508 = vweird.f32 %v502
        %vm509 = vmor %vm507, %vm508
        %v510 = vsel %vm509, %v502, %v506
        %v511 = vand.u32 2147483647, %v486
        %vm512 = vcmp.eq.f32.partialorder %v511, 8.507059e+37
        %v513 = vand.u32 %v486, 2147483648
        %v514 = vor.u32 1.1754944e-38, %v513
        %v515 = vsel %vm512, %v514, %v510
        %v516 = vmul.f32 1.0, %v515
        %v517 = vmul.f32 %v475, %v501
        %v518 = vmul.f32 %v477, %v516
        %v519 = vld [vmem:[#allocation8 + $0x1] sm:$0x1]
        %v520 = vld [vmem:[#allocation8 + $0x2] sm:$0x1]
        %521 = vadd.xlane.f32.xlu0 %v517
        %v522 = vpop.xlane.xlu0 %521
        %523 = vadd.xlane.f32.xlu0 %v518
        %v524 = vpop.xlane.xlu0 %523
        %v525 = vrcp.pop 128.0
        %v526 = vmul.f32 128.0, %v525
        %v527 = vsub.f32 1.0, %v526
        %v528 = vmul.f32 %v525, %v527
        %v529 = vadd.f32 %v525, %v528
        %vm530 = vweird.f32 %v525
        %v531 = vsel %vm530, %v525, %v529
        %v532 = vmul.f32 %v522, %v531
        %v533 = vmul.f32 %v524, %v531
        %v534 = vsub.f32 %v517, %v532
        %v535 = vsub.f32 %v518, %v533
        %v536 = vmul.f32 %v534, %v534
        %v537 = vmul.f32 %v535, %v535
        %538 = vadd.xlane.f32.xlu0 %v536
        %v539 = vpop.xlane.xlu0 %538
        %540 = vadd.xlane.f32.xlu0 %v537
        %v541 = vpop.xlane.xlu0 %540
        %v542 = vmul.f32 %v539, %v531
        %v543 = vmul.f32 %v541, %v531
        %v544 = vadd.f32 %v542, 1e-05
        %v545 = vadd.f32 %v543, 1e-05
        %v546 = vrsqrt.pop %v544
        %v547 = vmul.f32 %v546, %v544
        %v548 = vmul.f32 %v547, %v546
        %v549 = vmul.f32 0.5, %v548
        %v550 = vsub.f32 1.5, %v549
        %v551 = vmul.f32 %v546, %v550
        %vm552 = vweird.f32 %v544
        %vm553 = vweird.f32 %v546
        %vm554 = vmor %vm552, %vm553
        %v555 = vsel %vm554, %v546, %v551
        %v556 = vrsqrt.pop %v545
        %v557 = vmul.f32 %v556, %v545
        %v558 = vmul.f32 %v557, %v556
        %v559 = vmul.f32 0.5, %v558
        %v560 = vsub.f32 1.5, %v559
        %v561 = vmul.f32 %v556, %v560
        %vm562 = vweird.f32 %v545
        %vm563 = vweird.f32 %v556
        %vm564 = vmor %vm562, %vm563
        %v565 = vsel %vm564, %v556, %v561
        %v566 = vmul.f32 %v534, %v555
        %v567 = vmul.f32 %v535, %v565
        %v568 = vperm.slane %v519, 0
        %v569 = vmul.f32 %v566, %v568
        %v570 = vmul.f32 %v567, %v568
        %v571 = vperm.slane %v520, 0
        %v572 = vadd.f32 %v569, %v571
        %v573 = vadd.f32 %v570, %v571
        %v574 = vpack.c.bf16 %v573, %v572
        %v575 = vld [vmem:[#allocation10] sm:$0xf]
        %v576 = vld [vmem:[#allocation10 + $0x4] sm:$0xf]
        %v577 = vld [vmem:[#allocation10 + $0x8] sm:$0xf]
        %v578 = vld [vmem:[#allocation10 + $0xc] sm:$0xf]
        %v579 = vld [vmem:[#allocation10 + $0x10] sm:$0xf]
        %v580 = vld [vmem:[#allocation10 + $0x14] sm:$0xf]
        %v581 = vld [vmem:[#allocation10 + $0x18] sm:$0xf]
        %v582 = vld [vmem:[#allocation10 + $0x1c] sm:$0xf]
        %v583 = vld [vmem:[#allocation10 + $0x20] sm:$0xf]
        %v584 = vld [vmem:[#allocation10 + $0x24] sm:$0xf]
        %v585 = vld [vmem:[#allocation10 + $0x28] sm:$0xf]
        %v586 = vld [vmem:[#allocation10 + $0x2c] sm:$0xf]
        %v587 = vld [vmem:[#allocation10 + $0x30] sm:$0xf]
        %v588 = vld [vmem:[#allocation10 + $0x34] sm:$0xf]
        %v589 = vld [vmem:[#allocation10 + $0x38] sm:$0xf]
        %v590 = vld [vmem:[#allocation10 + $0x3c] sm:$0xf]
        %v591 = vld [vmem:[#allocation8 + $0x3] sm:$0x1]
        %v592 = vperm.slane %v591, 0
        %v609 = vunpack.c.l.b16 %v575
        %v610 = vunpack.c.l.b16 %v576
        %v611 = vunpack.c.l.b16 %v577
        %v612 = vunpack.c.l.b16 %v578
        %v613 = vunpack.c.l.b16 %v579
        %v614 = vunpack.c.l.b16 %v580
        %v615 = vunpack.c.l.b16 %v581
        %v616 = vunpack.c.l.b16 %v582
        %v617 = vunpack.c.l.b16 %v583
        %v618 = vunpack.c.l.b16 %v584
        %v619 = vunpack.c.l.b16 %v585
        %v620 = vunpack.c.l.b16 %v586
        %v621 = vunpack.c.l.b16 %v587
        %v622 = vunpack.c.l.b16 %v588
        %v623 = vunpack.c.l.b16 %v589
        %v624 = vunpack.c.l.b16 %v590
        %v625 = vpack.c.b16 %v610, %v609
        %v626 = vpack.c.b16 %v612, %v611
        %v627 = vpack.c.b16 %v614, %v613
        %v628 = vpack.c.b16 %v616, %v615
        %v629 = vpack.c.b16 %v618, %v617
        %v630 = vpack.c.b16 %v620, %v619
        %v631 = vpack.c.b16 %v622, %v621
        %v632 = vpack.c.b16 %v624, %v623
        %641 = vmatpush.bf16.msra.mxu0 %v632
        %642 = vmatpush.bf16.msra.mxu0 %v631
        %643 = vmatpush.bf16.msra.mxu0 %v630
        %644 = vmatpush.bf16.msra.mxu0 %v629
        %645 = vmatpush.bf16.msra.mxu0 %v628
        %646 = vmatpush.bf16.msra.mxu0 %v627
        %647 = vmatpush.bf16.msra.mxu0 %v626
        %648 = vmatpush.bf16.msra.mxu0 %v625
        %649 = vmatmul.bf16.gmra.mxu0 %v574
        %v650 = vpop.f32.mrf.mxu0
        %v651 = vadd.f32 %v592, %v650
        %v652 = vpop.f32.mrf.mxu0
        %v653 = vadd.f32 %v592, %v652
        %654 = vdwg.mxu0
        %v655 = vxor.u32 %v651, 2147483648
        %v656 = vxor.u32 %v653, 2147483648
        %v657 = vmul.f32 %v655, 1.442695
        %v658 = vpow.pop %v657
        %v659 = vmul.f32 %v656, 1.442695
        %v660 = vpow.pop %v659
        %v661 = vadd.f32 %v658, 1.0
        %v662 = vadd.f32 %v660, 1.0
        %v663 = vrcp.pop %v661
        %v664 = vmul.f32 %v661, %v663
        %v665 = vsub.f32 1.0, %v664
        %v666 = vmul.f32 %v663, %v665
        %v667 = vadd.f32 %v663, %v666
        %vm668 = vweird.f32 %v661
        %vm669 = vweird.f32 %v663
        %vm670 = vmor %vm668, %vm669
        %v671 = vsel %vm670, %v663, %v667
        %v672 = vand.u32 2147483647, %v661
        %vm673 = vcmp.eq.f32.partialorder %v672, 8.507059e+37
        %v674 = vand.u32 %v661, 2147483648
        %v675 = vor.u32 1.1754944e-38, %v674
        %v676 = vsel %vm673, %v675, %v671
        %v677 = vmul.f32 1.0, %v676
        %v678 = vrcp.pop %v662
        %v679 = vmul.f32 %v662, %v678
        %v680 = vsub.f32 1.0, %v679
        %v681 = vmul.f32 %v678, %v680
        %v682 = vadd.f32 %v678, %v681
        %vm683 = vweird.f32 %v662
        %vm684 = vweird.f32 %v678
        %vm685 = vmor %vm683, %vm684
        %v686 = vsel %vm685, %v678, %v682
        %v687 = vand.u32 2147483647, %v662
        %vm688 = vcmp.eq.f32.partialorder %v687, 8.507059e+37
        %v689 = vand.u32 %v662, 2147483648
        %v690 = vor.u32 1.1754944e-38, %v689
        %v691 = vsel %vm688, %v690, %v686
        %v692 = vmul.f32 1.0, %v691
        %v693 = vmul.f32 %v651, %v677
        %v694 = vmul.f32 %v653, %v692
        %v695 = vld [vmem:[#allocation8 + $0x4] sm:$0x1]
        %v696 = vld [vmem:[#allocation8 + $0x5] sm:$0x1]
        %697 = vadd.xlane.f32.xlu0 %v693
        %v698 = vpop.xlane.xlu0 %697
        %699 = vadd.xlane.f32.xlu0 %v694
        %v700 = vpop.xlane.xlu0 %699
        %v701 = vmul.f32 %v698, %v531
        %v702 = vmul.f32 %v700, %v531
        %v703 = vsub.f32 %v693, %v701
        %v704 = vsub.f32 %v694, %v702
        %v705 = vmul.f32 %v703, %v703
        %v706 = vmul.f32 %v704, %v704
        %707 = vadd.xlane.f32.xlu0 %v705
        %v708 = vpop.xlane.xlu0 %707
        %709 = vadd.xlane.f32.xlu0 %v706
        %v710 = vpop.xlane.xlu0 %709
        %v711 = vmul.f32 %v708, %v531
        %v712 = vmul.f32 %v710, %v531
        %v713 = vadd.f32 %v711, 1e-05
        %v714 = vadd.f32 %v712, 1e-05
        %v715 = vrsqrt.pop %v713
        %v716 = vmul.f32 %v715, %v713
        %v717 = vmul.f32 %v716, %v715
        %v718 = vmul.f32 0.5, %v717
        %v719 = vsub.f32 1.5, %v718
        %v720 = vmul.f32 %v715, %v719
        %vm721 = vweird.f32 %v713
        %vm722 = vweird.f32 %v715
        %vm723 = vmor %vm721, %vm722
        %v724 = vsel %vm723, %v715, %v720
        %v725 = vrsqrt.pop %v714
        %v726 = vmul.f32 %v725, %v714
        %v727 = vmul.f32 %v726, %v725
        %v728 = vmul.f32 0.5, %v727
        %v729 = vsub.f32 1.5, %v728
        %v730 = vmul.f32 %v725, %v729
        %vm731 = vweird.f32 %v714
        %vm732 = vweird.f32 %v725
        %vm733 = vmor %vm731, %vm732
        %v734 = vsel %vm733, %v725, %v730
        %v735 = vmul.f32 %v703, %v724
        %v736 = vmul.f32 %v704, %v734
        %v737 = vperm.slane %v695, 0
        %v738 = vmul.f32 %v735, %v737
        %v739 = vmul.f32 %v736, %v737
        %v740 = vperm.slane %v696, 0
        %v741 = vadd.f32 %v738, %v740
        %v742 = vadd.f32 %v739, %v740
        %v743 = vpack.c.bf16 %v742, %v741
        %v744 = vld [vmem:[#allocation11] sm:$0xf]
        %v745 = vld [vmem:[#allocation11 + $0x4] sm:$0xf]
        %v746 = vld [vmem:[#allocation11 + $0x8] sm:$0xf]
        %v747 = vld [vmem:[#allocation11 + $0xc] sm:$0xf]
        %v748 = vld [vmem:[#allocation11 + $0x10] sm:$0xf]
        %v749 = vld [vmem:[#allocation11 + $0x14] sm:$0xf]
        %v750 = vld [vmem:[#allocation11 + $0x18] sm:$0xf]
        %v751 = vld [vmem:[#allocation11 + $0x1c] sm:$0xf]
        %v752 = vld [vmem:[#allocation11 + $0x20] sm:$0xf]
        %v753 = vld [vmem:[#allocation11 + $0x24] sm:$0xf]
        %v754 = vld [vmem:[#allocation11 + $0x28] sm:$0xf]
        %v755 = vld [vmem:[#allocation11 + $0x2c] sm:$0xf]
        %v756 = vld [vmem:[#allocation11 + $0x30] sm:$0xf]
        %v757 = vld [vmem:[#allocation11 + $0x34] sm:$0xf]
        %v758 = vld [vmem:[#allocation11 + $0x38] sm:$0xf]
        %v759 = vld [vmem:[#allocation11 + $0x3c] sm:$0xf]
        %v760 = vld [vmem:[%s6] sm:$0x1]
        %v762 = vperm.slane %v760, 0
        %v780 = vunpack.c.l.b16 %v744
        %v781 = vunpack.c.l.b16 %v745
        %v782 = vunpack.c.l.b16 %v746
        %v783 = vunpack.c.l.b16 %v747
        %v784 = vunpack.c.l.b16 %v748
        %v785 = vunpack.c.l.b16 %v749
        %v786 = vunpack.c.l.b16 %v750
        %v787 = vunpack.c.l.b16 %v751
        %v788 = vunpack.c.l.b16 %v752
        %v789 = vunpack.c.l.b16 %v753
        %v790 = vunpack.c.l.b16 %v754
        %v791 = vunpack.c.l.b16 %v755
        %v792 = vunpack.c.l.b16 %v756
        %v793 = vunpack.c.l.b16 %v757
        %v794 = vunpack.c.l.b16 %v758
        %v795 = vunpack.c.l.b16 %v759
        %v796 = vpack.c.b16 %v781, %v780
        %v797 = vpack.c.b16 %v783, %v782
        %v798 = vpack.c.b16 %v785, %v784
        %v799 = vpack.c.b16 %v787, %v786
        %v800 = vpack.c.b16 %v789, %v788
        %v801 = vpack.c.b16 %v791, %v790
        %v802 = vpack.c.b16 %v793, %v792
        %v803 = vpack.c.b16 %v795, %v794
        %812 = vmatpush.bf16.msra.mxu0 %v803
        %813 = vmatpush.bf16.msra.mxu0 %v802
        %814 = vmatpush.bf16.msra.mxu0 %v801
        %815 = vmatpush.bf16.msra.mxu0 %v800
        %816 = vmatpush.bf16.msra.mxu0 %v799
        %817 = vmatpush.bf16.msra.mxu0 %v798
        %818 = vmatpush.bf16.msra.mxu0 %v797
        %819 = vmatpush.bf16.msra.mxu0 %v796
        %820 = vmatmul.bf16.gmra.mxu0 %v743
        %v821 = vpop.f32.mrf.mxu0
        %v822 = vadd.f32 %v762, %v821
        %v823 = vpop.f32.mrf.mxu0
        %v824 = vadd.f32 %v762, %v823
        %825 = vdwg.mxu0
        %826 = vst [vmem:[%s377] sm:$0xff] %v822
        %827 = vst [vmem:[%s377 + $0x8] sm:$0xff] %v824
        %s828 = sand.u32 %s187, 1
        %s829 = scalar_lea.sflag [#allocation4], %s828
        %s830 = sand.u32 %s187, 1
        %s831 = smul.addr %s830, 16
        %s832 = scalar_lea.vmem [#allocation13], %s831
        // Predicated region
        $region73: #{tpu_custom_call.1} parent=47 // pred_check
          %p833 = pneg %p197
        $region74: #{tpu_custom_call.1} parent=47 // pred_check_branch
          %835 = sbr.rel (%p833) target = $region76
        $region75: #{tpu_custom_call.1} parent=47 // pred_region
          %s836 = smul.u32 2, %s27
          %838 = vsyncadd %s829, 0
          %s839 = smul.addr %s836, 8
          %s840 = scalar_lea.hbm %s7, %s839
          %s841 = sshll.u32 %s832, 4
          %s842 = int_to_ptr.vmem [resolvable:$true] %s841
          %s843 = sshll.u32 %s840, 4
          %s844 = int_to_ptr.hbm [resolvable:$true] %s843
          %849 = dma.vmem_to_hbm [thread:$0]  %s842, 256, %s844, %s829, 128, 128, 8
        $region76: #{tpu_custom_call.1} parent=47 // pred_fallthru
          _
      $region48: #{tpu_custom_call.1} parent=5 // pred_fallthru
        _
      %p850 = scmp.le.s32.totalorder 2, %s22
      // Predicated region
      $region77: #{tpu_custom_call.1} parent=5 // pred_check
        %p851 = pneg %p850
      $region78: #{tpu_custom_call.1} parent=5 // pred_check_branch
        %853 = sbr.rel (%p851) target = $region80
      $region79: #{tpu_custom_call.1} parent=5 // pred_region
        %s854 = ssub.s32 %s22, 2
        // Predicated region
        $region81: #{tpu_custom_call.1} parent=79 // pred_check
          %p855 = pneg %p203
        $region82: #{tpu_custom_call.1} parent=79 // pred_check_branch
          %857 = sbr.rel (%p855) target = $region84
        $region83: #{tpu_custom_call.1} parent=79 // pred_region
          %s858 = sand.u32 %s188, 1
          %s859 = scalar_lea.sflag [#allocation4], %s858
          %s860 = sand.u32 %s188, 1
          %s861 = smul.addr %s860, 16
          %s862 = scalar_lea.vmem [#allocation13], %s861
          %864 = dma.done %s859, 256
        $region84: #{tpu_custom_call.1} parent=79 // pred_fallthru
          _
      $region80: #{tpu_custom_call.1} parent=5 // pred_fallthru
        _
    $region6: #{tpu_custom_call.1} parent=1 // loop_footer
      %s26 = sadd.s32 1, %s22
    $region7: #{tpu_custom_call.1} parent=1 // loop_footer_branch
      %21 = sbr.rel target = $region3
    $region8: #{tpu_custom_call.1} parent=1 // loop_exit
      _
    %865 = vsyncpa [#allocation3], 1
    %s866 = scalar_lea.sflag [#allocation3], 1
    %867 = vsyncpa %s866, 1
    %868 = vsyncpa [#allocation6], 1
    %869 = vsyncpa [#allocation9], 1
    %870 = vsyncpa [#allocation12], 1
    %871 = vsyncpa [#allocation4], 1
    %s872 = scalar_lea.sflag [#allocation4], 1
    %873 = vsyncpa %s872, 1

</llo_original>
